<compile_context>
chip_gen: v7x
topology: tpu7x:2x2x1
jax: 0.10.0
libtpu: 0.0.40
codegen_flags: <defaults>
</compile_context>

<pallas_src>
import functools

import jax
import jax.numpy as jnp
from jax import lax
from jax.experimental import pallas as pl
from jax.experimental.pallas import tpu as pltpu


def _conv3x3_shuffle_prelu_kernel(x_main_ref, x_top_ref, x_bot_ref, w_ref,
                                  b_ref, a_ref, o_ref):
    # x_main_ref: (1, TH, W, 3*Cin) bf16   rows [t*TH, t*TH+TH), dx taps packed in lanes
    # x_top_ref : (1, 1,  W, 3*Cin) bf16   row t*TH-1 (clamped; zero-masked at t==0)
    # x_bot_ref : (1, 1,  W, 3*Cin) bf16   row t*TH+TH (clamped; zero-masked at last t)
    # w_ref     : (3, 3*Cin, 4C)    bf16   per-dy im2col weight, cols ordered (i, j, c)
    # b_ref     : (1, 4C)           f32    bias, cols ordered (i, j, c)
    # a_ref     : (1,)              f32    shared PReLU alpha (SMEM)
    # o_ref     : (1, TH, 2, W, 2C)        pixel-shuffled output block
    _, TH, W, K = x_main_ref.shape
    Cout = w_ref.shape[2]
    two_c = Cout // 2

    t = pl.program_id(1)
    num_t = pl.num_programs(1)

    # 1-row halos; conv zero-padding along H is applied here (W padding is
    # already folded into the dx packing done in the wrapper).
    zero_row = jnp.zeros((1, W, K), x_top_ref.dtype)
    top = jnp.where(t > 0, x_top_ref[0], zero_row)
    bot = jnp.where(t < num_t - 1, x_bot_ref[0], zero_row)

    # (TH+2, W, 3*Cin) slab; concat along the outer (row) axis only -> no
    # lane/sublane shuffling, and no 9x-wide patch is ever materialized.
    slab = jnp.concatenate([top, x_main_ref[0], bot], axis=0)

    # Three accumulated dy-matmuls, K = 3*Cin each, f32 accumulation on the MXU.
    m = TH * W
    acc = jnp.dot(slab[0:TH].reshape(m, K), w_ref[0],
                  preferred_element_type=jnp.float32)
    acc = acc + jnp.dot(slab[1:TH + 1].reshape(m, K), w_ref[1],
                        preferred_element_type=jnp.float32)
    acc = acc + jnp.dot(slab[2:TH + 2].reshape(m, K), w_ref[2],
                        preferred_element_type=jnp.float32)

    acc = acc + b_ref[...]                                  # bias, f32
    alpha = a_ref[0]
    acc = jnp.where(acc >= 0, acc, alpha * acc)             # PReLU (shared alpha)

    # Fused PixelShuffle store: columns are ordered (i, j, c), so the two
    # output sub-rows (i = 0, 1) are contiguous 2C-wide lane chunks
    # (vreg-aligned at the default C = 64).
    acc = acc.reshape(TH, W, Cout).astype(o_ref.dtype)
    o_ref[0, :, 0, :, :] = acc[:, :, :two_c]                # i = 0 rows
    o_ref[0, :, 1, :, :] = acc[:, :, two_c:]                # i = 1 rows


def _vmem_budget_bytes():
    """~70% of per-core VMEM: ~45 MiB on v7x, ~90 MiB on v5e/v6e."""
    cap = 64 * 1024 * 1024
    try:
        cap = int(getattr(pltpu.get_tpu_info(), "vmem_capacity_bytes", cap))
    except Exception:
        pass
    return min(int(cap * 0.7), 100 * 1024 * 1024)


def _pick_row_tile(N, H, W, C, budget_bytes):
    """Largest divisor of H whose per-step VMEM estimate fits the budget."""
    K, Cout = 3 * C, 4 * C
    # Fixed per step: double-buffered halo rows, double-buffered weight, bias.
    fixed = 4 * (W * K * 2) + 2 * (3 * K * Cout * 2) + 4 * Cout
    # Per TH-row: double-buffered main input and f32 output blocks, plus the
    # live slab and f32 accumulator values.
    per_row = (2 * (W * K * 2) + 2 * (2 * W * 2 * C * 4)
               + (W * K * 2) + (W * Cout * 4))
    best = 1
    for th in range(1, H + 1):
        if H % th:
            continue
        if th * W > 8192:
            break
        if fixed + th * per_row <= budget_bytes:
            best = th
    # Megacore balance: keep at least 2 parallel grid steps when possible.
    if N * (H // best) < 2:
        for th in range(best, 0, -1):
            if H % th == 0 and N * (H // th) >= 2:
                best = th
                break
    return best


@functools.partial(jax.jit,
                   static_argnames=("row_tile", "vmem_limit_bytes", "out_dtype"))
def _forward(x_nchw, weight, bias, alpha, *, row_tile, vmem_limit_bytes,
             out_dtype):
    N, C, H, W = x_nchw.shape
    Cout, Cin = weight.shape[0], weight.shape[1]
    assert Cout == 4 * C and Cin == C
    TH = row_tile
    assert H % TH == 0
    num_t = H // TH
    K = 3 * Cin

    # Layout glue: NCHW -> NHWC, bf16 cast, W zero-pad, dx-tap packing.  XLA
    # fuses this into one pass over the (smallest) input tensor; H is NOT
    # padded (the kernel fetches its 1-row halos via extra BlockSpecs).
    x_nhwc = jnp.transpose(x_nchw, (0, 2, 3, 1)).astype(jnp.bfloat16)
    xw = jnp.pad(x_nhwc, ((0, 0), (0, 0), (1, 1), (0, 0)))          # (N, H, W+2, C)
    xk = jnp.concatenate([xw[:, :, d:d + W, :] for d in range(3)],
                         axis=-1)                                    # (N, H, W, 3C)

    # Weight OIHW -> per-dy im2col [dy, (dx, cin), (i, j, c)], bf16.  The output
    # axis permutation (c,i,j) -> (i,j,c) is what lets the kernel store the
    # pixel-shuffled layout with plain lane slices.
    w_t = jnp.transpose(weight, (2, 3, 1, 0))                        # (3,3,Cin,4C) [dy,dx,ci,o]
    w_t = w_t.reshape(3, 3, Cin, C, 2, 2)                            # o -> (c,i,j)
    w_t = jnp.transpose(w_t, (0, 1, 2, 4, 5, 3))                     # -> (i,j,c)
    w_dy = w_t.reshape(3, K, Cout).astype(jnp.bfloat16)
    b_perm = (jnp.transpose(bias.reshape(C, 2, 2), (1, 2, 0))
              .reshape(1, Cout).astype(jnp.float32))
    a1 = jnp.asarray(alpha, jnp.float32).reshape(1)

    y = pl.pallas_call(
        _conv3x3_shuffle_prelu_kernel,
        out_shape=jax.ShapeDtypeStruct((N, H, 2, W, 2 * C), out_dtype),
        grid=(N, num_t),
        in_specs=[
            # Main TH-row tile (non-overlapping).
            pl.BlockSpec((1, TH, W, K), lambda n, t: (n, t, 0, 0)),
            # Top halo row: block size 1 along H => returned index IS the row.
            pl.BlockSpec((1, 1, W, K),
                         lambda n, t: (n, jnp.maximum(t * TH - 1, 0), 0, 0)),
            # Bottom halo row.
            pl.BlockSpec((1, 1, W, K),
                         lambda n, t: (n, jnp.minimum(t * TH + TH, H - 1), 0, 0)),
            pl.BlockSpec((3, K, Cout), lambda n, t: (0, 0, 0)),
            pl.BlockSpec((1, Cout), lambda n, t: (0, 0)),
            pl.BlockSpec(memory_space=pltpu.MemorySpace.SMEM),
        ],
        out_specs=pl.BlockSpec((1, TH, 2, W, 2 * C),
                               lambda n, t: (n, t, 0, 0, 0)),
        compiler_params=pltpu.CompilerParams(
            dimension_semantics=("parallel", "parallel"),
            vmem_limit_bytes=vmem_limit_bytes),
    )(xk, xk, xk, w_dy, b_perm, a1)

    # (N, H, 2, W, 2C) -> (N, 2H, 2W, C) is a free row-major reshape (the
    # pixel shuffle already happened inside the kernel).  The single remaining
    # transpose restores the module's NCHW output; drop it for channels-last
    # pipelines.
    y = y.reshape(N, 2 * H, 2 * W, C)
    return jnp.transpose(y, (0, 3, 1, 2))


def subpixel_conv_layer(x_nchw, weight, bias, alpha, *, row_tile=None,
                        out_dtype=None):
    """
    x_nchw : [N, C, H, W]     (PyTorch layout)
    weight : [4C, C, 3, 3]    (PyTorch Conv2d weight, OIHW)
    bias   : [4C]
    alpha  : scalar           (nn.PReLU() default: one shared parameter)
    returns: [N, C, 2H, 2W]
    """
    N, C, H, W = x_nchw.shape
    # PReLU-before-shuffle is only valid for a single shared alpha.
    assert int(jnp.size(jnp.asarray(alpha))) == 1, \
        "per-channel PReLU alpha is not supported by the fused-shuffle kernel"
    budget = _vmem_budget_bytes()
    if row_tile is None:
        row_tile = _pick_row_tile(N, H, W, C, budget)
    out_dtype = jnp.dtype(out_dtype) if out_dtype is not None else jnp.dtype(x_nchw.dtype)
    return _forward(x_nchw, weight, bias, alpha, row_tile=int(row_tile),
                    vmem_limit_bytes=int(budget), out_dtype=out_dtype)


def _reference(x_nchw, weight, bias, alpha):
    """Pure-JAX reference matching the PyTorch module, with the same bf16
    rounding of conv inputs as the kernel and f32 accumulation."""
    xb = x_nchw.astype(jnp.bfloat16).astype(jnp.float32)
    wb = weight.astype(jnp.bfloat16).astype(jnp.float32)
    y = lax.conv_general_dilated(
        xb, wb, window_strides=(1, 1), padding=((1, 1), (1, 1)),
        dimension_numbers=("NCHW", "OIHW", "NCHW"),
        precision=lax.Precision.HIGHEST)
    y = y + bias.reshape(1, -1, 1, 1)
    N, C4, H, W = y.shape
    C = C4 // 4
    y = y.reshape(N, C, 2, 2, H, W)
    y = jnp.transpose(y, (0, 1, 4, 2, 5, 3))
    y = y.reshape(N, C, 2 * H, 2 * W)
    return jnp.where(y >= 0, y, alpha * y)


if __name__ == "__main__":
    # Small deterministic setup: channels=16 (module default is 64), 16x16
    # spatial, row_tile=8 -> 2 row tiles per image (exercises the halo logic
    # and the fused pixel-shuffle store).
    N, C, H, W = 2, 16, 16, 16
    key = jax.random.PRNGKey(0)
    kx, kw, kb = jax.random.split(key, 3)

    x = jax.random.normal(kx, (N, C, H, W), jnp.float32)
    fan_in = C * 3 * 3
    weight = jax.random.normal(kw, (4 * C, C, 3, 3), jnp.float32) / jnp.sqrt(fan_in)
    bias = 0.1 * jax.random.normal(kb, (4 * C,), jnp.float32)
    alpha = jnp.float32(0.25)  # PyTorch nn.PReLU() default init

    out = subpixel_conv_layer(x, weight, bias, alpha, row_tile=8)
    out = jax.block_until_ready(out)

    ref = _reference(x, weight, bias, alpha)
    assert out.shape == (N, C, 2 * H, 2 * W), out.shape
    assert out.dtype == jnp.float32
    err = float(jnp.max(jnp.abs(out - ref)))
    assert err < 2e-3, err

    print("KERNEL_OK")
</pallas_src>

<mosaic_0001>
module attributes {stable_mosaic.version = 11 : i64} {
  func.func @_conv3x3_shuffle_prelu_kernel(%arg0: i32, %arg1: i32, %arg2: memref<1x8x16x48xbf16, #tpu.memory_space<vmem>>, %arg3: memref<1x1x16x48xbf16, #tpu.memory_space<vmem>>, %arg4: memref<1x1x16x48xbf16, #tpu.memory_space<vmem>>, %arg5: memref<3x48x64xbf16, #tpu.memory_space<vmem>>, %arg6: memref<1x64xf32, #tpu.memory_space<vmem>>, %arg7: memref<1xf32, #tpu.memory_space<smem>>, %arg8: memref<1x8x2x16x32xf32, #tpu.memory_space<vmem>>) attributes {dimension_semantics = [#tpu.dimension_semantics<parallel>, #tpu.dimension_semantics<parallel>], iteration_bounds = array<i64: 2, 2>, scalar_prefetch = 0 : i64, scratch_operands = 0 : i64, tpu.core_type = #tpu.core_type<tc>, window_params = [{transform_indices = @transform_0, window_bounds = array<i64: 1, 8, 16, 48>}, {transform_indices = @transform_1, window_bounds = array<i64: 1, 1, 16, 48>}, {transform_indices = @transform_2, window_bounds = array<i64: 1, 1, 16, 48>}, {pipeline_mode = #tpu.pipeline_mode<synchronous>, transform_indices = @transform_3, window_bounds = array<i64: 3, 48, 64>}, {pipeline_mode = #tpu.pipeline_mode<synchronous>, transform_indices = @transform_4, window_bounds = array<i64: 1, 64>}, {transform_indices = @transform_5, window_bounds = array<i64: 1>}, {transform_indices = @transform_6, window_bounds = array<i64: 1, 8, 2, 16, 32>}]} {
    %cst = arith.constant 0.000000e+00 : bf16
    %0 = vector.broadcast %cst : bf16 to vector<1x16x48xbf16>
    %c0_i32 = arith.constant 0 : i32
    %1 = arith.cmpi sgt, %arg1, %c0_i32 : i32
    %c0 = arith.constant 0 : index
    %c0_0 = arith.constant 0 : index
    %c0_1 = arith.constant 0 : index
    %c0_2 = arith.constant 0 : index
    %2 = vector.load %arg3[%c0, %c0_0, %c0_1, %c0_2] : memref<1x1x16x48xbf16, #tpu.memory_space<vmem>>, vector<1x1x16x48xbf16>
    %3 = vector.shape_cast %2 : vector<1x1x16x48xbf16> to vector<1x16x48xbf16>
    %4 = arith.select %1, %3, %0 : vector<1x16x48xbf16>
    %c1_i32 = arith.constant 1 : i32
    %5 = arith.cmpi slt, %arg1, %c1_i32 : i32
    %c0_3 = arith.constant 0 : index
    %c0_4 = arith.constant 0 : index
    %c0_5 = arith.constant 0 : index
    %c0_6 = arith.constant 0 : index
    %6 = vector.load %arg4[%c0_3, %c0_4, %c0_5, %c0_6] : memref<1x1x16x48xbf16, #tpu.memory_space<vmem>>, vector<1x1x16x48xbf16>
    %7 = vector.shape_cast %6 : vector<1x1x16x48xbf16> to vector<1x16x48xbf16>
    %8 = arith.select %5, %7, %0 : vector<1x16x48xbf16>
    %c0_7 = arith.constant 0 : index
    %c0_8 = arith.constant 0 : index
    %c0_9 = arith.constant 0 : index
    %c0_10 = arith.constant 0 : index
    %9 = vector.load %arg2[%c0_7, %c0_8, %c0_9, %c0_10] : memref<1x8x16x48xbf16, #tpu.memory_space<vmem>>, vector<1x8x16x48xbf16>
    %10 = vector.shape_cast %9 : vector<1x8x16x48xbf16> to vector<8x16x48xbf16>
    %11 = tpu.concatenate %4, %10, %8 in 0 : vector<1x16x48xbf16>, vector<8x16x48xbf16>, vector<1x16x48xbf16> -> vector<10x16x48xbf16>
    %12 = vector.extract_strided_slice %11 {offsets = [0, 0, 0], sizes = [8, 16, 48], strides = [1, 1, 1]} : vector<10x16x48xbf16> to vector<8x16x48xbf16>
    %13 = vector.shape_cast %12 : vector<8x16x48xbf16> to vector<128x48xbf16>
    %c0_11 = arith.constant 0 : index
    %c0_12 = arith.constant 0 : index
    %c0_13 = arith.constant 0 : index
    %14 = vector.load %arg5[%c0_11, %c0_12, %c0_13] : memref<3x48x64xbf16, #tpu.memory_space<vmem>>, vector<1x48x64xbf16>
    %15 = vector.shape_cast %14 : vector<1x48x64xbf16> to vector<48x64xbf16>
    %cst_14 = arith.constant dense<0.000000e+00> : vector<128x64xf32>
    %16 = tpu.matmul %13, %15, %cst_14 {dimension_numbers = #tpu.dot_dimension_numbers<[1], [0], [0], [1], [0, 0, 1, 1], [], []>} : vector<128x48xbf16>, vector<48x64xbf16>, vector<128x64xf32> -> vector<128x64xf32>
    %17 = vector.extract_strided_slice %11 {offsets = [1, 0, 0], sizes = [8, 16, 48], strides = [1, 1, 1]} : vector<10x16x48xbf16> to vector<8x16x48xbf16>
    %18 = vector.shape_cast %17 : vector<8x16x48xbf16> to vector<128x48xbf16>
    %c1 = arith.constant 1 : index
    %c0_15 = arith.constant 0 : index
    %c0_16 = arith.constant 0 : index
    %19 = vector.load %arg5[%c1, %c0_15, %c0_16] : memref<3x48x64xbf16, #tpu.memory_space<vmem>>, vector<1x48x64xbf16>
    %20 = vector.shape_cast %19 : vector<1x48x64xbf16> to vector<48x64xbf16>
    %cst_17 = arith.constant dense<0.000000e+00> : vector<128x64xf32>
    %21 = tpu.matmul %18, %20, %cst_17 {dimension_numbers = #tpu.dot_dimension_numbers<[1], [0], [0], [1], [0, 0, 1, 1], [], []>} : vector<128x48xbf16>, vector<48x64xbf16>, vector<128x64xf32> -> vector<128x64xf32>
    %22 = arith.addf %16, %21 : vector<128x64xf32>
    %23 = vector.extract_strided_slice %11 {offsets = [2, 0, 0], sizes = [8, 16, 48], strides = [1, 1, 1]} : vector<10x16x48xbf16> to vector<8x16x48xbf16>
    %24 = vector.shape_cast %23 : vector<8x16x48xbf16> to vector<128x48xbf16>
    %c2 = arith.constant 2 : index
    %c0_18 = arith.constant 0 : index
    %c0_19 = arith.constant 0 : index
    %25 = vector.load %arg5[%c2, %c0_18, %c0_19] : memref<3x48x64xbf16, #tpu.memory_space<vmem>>, vector<1x48x64xbf16>
    %26 = vector.shape_cast %25 : vector<1x48x64xbf16> to vector<48x64xbf16>
    %cst_20 = arith.constant dense<0.000000e+00> : vector<128x64xf32>
    %27 = tpu.matmul %24, %26, %cst_20 {dimension_numbers = #tpu.dot_dimension_numbers<[1], [0], [0], [1], [0, 0, 1, 1], [], []>} : vector<128x48xbf16>, vector<48x64xbf16>, vector<128x64xf32> -> vector<128x64xf32>
    %28 = arith.addf %22, %27 : vector<128x64xf32>
    %c0_21 = arith.constant 0 : index
    %c0_22 = arith.constant 0 : index
    %29 = vector.load %arg6[%c0_21, %c0_22] : memref<1x64xf32, #tpu.memory_space<vmem>>, vector<1x64xf32>
    %30 = vector.broadcast %29 : vector<1x64xf32> to vector<128x64xf32>
    %31 = arith.addf %28, %30 : vector<128x64xf32>
    %c0_23 = arith.constant 0 : index
    %32 = memref.load %arg7[%c0_23] : memref<1xf32, #tpu.memory_space<smem>>
    %cst_24 = arith.constant 0.000000e+00 : f32
    %33 = vector.broadcast %cst_24 : f32 to vector<128x64xf32>
    %34 = arith.cmpf oge, %31, %33 : vector<128x64xf32>
    %35 = vector.broadcast %32 : f32 to vector<128x64xf32>
    %36 = arith.mulf %35, %31 : vector<128x64xf32>
    %37 = arith.select %34, %31, %36 : vector<128x64xi1>, vector<128x64xf32>
    %38 = vector.shape_cast %37 : vector<128x64xf32> to vector<8x16x64xf32>
    %39 = vector.extract_strided_slice %38 {offsets = [0, 0, 0], sizes = [8, 16, 32], strides = [1, 1, 1]} : vector<8x16x64xf32> to vector<8x16x32xf32>
    %c0_25 = arith.constant 0 : index
    %c0_26 = arith.constant 0 : index
    %c0_27 = arith.constant 0 : index
    %c0_28 = arith.constant 0 : index
    %c0_29 = arith.constant 0 : index
    %40 = vector.load %arg8[%c0_25, %c0_26, %c0_27, %c0_28, %c0_29] : memref<1x8x2x16x32xf32, #tpu.memory_space<vmem>>, vector<1x8x1x16x32xf32>
    %41 = vector.shape_cast %40 : vector<1x8x1x16x32xf32> to vector<8x16x32xf32>
    %42 = vector.shape_cast %39 : vector<8x16x32xf32> to vector<1x8x1x16x32xf32>
    tpu.vector_store %arg8[%c0_25, %c0_26, %c0_27, %c0_28, %c0_29], %42 {strides = array<i32>} : memref<1x8x2x16x32xf32, #tpu.memory_space<vmem>>, vector<1x8x1x16x32xf32>,
    %43 = vector.extract_strided_slice %38 {offsets = [0, 0, 32], sizes = [8, 16, 32], strides = [1, 1, 1]} : vector<8x16x64xf32> to vector<8x16x32xf32>
    %c0_30 = arith.constant 0 : index
    %c0_31 = arith.constant 0 : index
    %c1_32 = arith.constant 1 : index
    %c0_33 = arith.constant 0 : index
    %c0_34 = arith.constant 0 : index
    %44 = vector.load %arg8[%c0_30, %c0_31, %c1_32, %c0_33, %c0_34] : memref<1x8x2x16x32xf32, #tpu.memory_space<vmem>>, vector<1x8x1x16x32xf32>
    %45 = vector.shape_cast %44 : vector<1x8x1x16x32xf32> to vector<8x16x32xf32>
    %46 = vector.shape_cast %43 : vector<8x16x32xf32> to vector<1x8x1x16x32xf32>
    tpu.vector_store %arg8[%c0_30, %c0_31, %c1_32, %c0_33, %c0_34], %46 {strides = array<i32>} : memref<1x8x2x16x32xf32, #tpu.memory_space<vmem>>, vector<1x8x1x16x32xf32>,
    return
  }
  func.func @transform_0(%arg0: i32, %arg1: i32) -> (i32, i32, i32, i32) {
    %c0_i32 = arith.constant 0 : i32
    %c0_i32_0 = arith.constant 0 : i32
    %c0_i32_1 = arith.constant 0 : i32
    return %arg0, %arg1, %c0_i32, %c0_i32_0 : i32, i32, i32, i32
  }
  func.func @transform_1(%arg0: i32, %arg1: i32) -> (i32, i32, i32, i32) {
    %c8_i32 = arith.constant 8 : i32
    %0 = arith.muli %arg1, %c8_i32 : i32
    %c1_i32 = arith.constant 1 : i32
    %1 = arith.subi %0, %c1_i32 : i32
    %c0_i32 = arith.constant 0 : i32
    %2 = arith.maxsi %1, %c0_i32 : i32
    %c0_i32_0 = arith.constant 0 : i32
    %c0_i32_1 = arith.constant 0 : i32
    %c0_i32_2 = arith.constant 0 : i32
    return %arg0, %2, %c0_i32_0, %c0_i32_1 : i32, i32, i32, i32
  }
  func.func @transform_2(%arg0: i32, %arg1: i32) -> (i32, i32, i32, i32) {
    %c8_i32 = arith.constant 8 : i32
    %0 = arith.muli %arg1, %c8_i32 : i32
    %c8_i32_0 = arith.constant 8 : i32
    %1 = arith.addi %0, %c8_i32_0 : i32
    %c15_i32 = arith.constant 15 : i32
    %2 = arith.minsi %1, %c15_i32 : i32
    %c0_i32 = arith.constant 0 : i32
    %c0_i32_1 = arith.constant 0 : i32
    %c0_i32_2 = arith.constant 0 : i32
    return %arg0, %2, %c0_i32, %c0_i32_1 : i32, i32, i32, i32
  }
  func.func @transform_3(%arg0: i32, %arg1: i32) -> (i32, i32, i32) {
    %c0_i32 = arith.constant 0 : i32
    %c0_i32_0 = arith.constant 0 : i32
    %c0_i32_1 = arith.constant 0 : i32
    %c0_i32_2 = arith.constant 0 : i32
    return %c0_i32, %c0_i32_0, %c0_i32_1 : i32, i32, i32
  }
  func.func @transform_4(%arg0: i32, %arg1: i32) -> (i32, i32) {
    %c0_i32 = arith.constant 0 : i32
    %c0_i32_0 = arith.constant 0 : i32
    %c0_i32_1 = arith.constant 0 : i32
    return %c0_i32, %c0_i32_0 : i32, i32
  }
  func.func @transform_5(%arg0: i32, %arg1: i32) -> i32 {
    %c0_i32 = arith.constant 0 : i32
    %c0_i32_0 = arith.constant 0 : i32
    return %c0_i32 : i32
  }
  func.func @transform_6(%arg0: i32, %arg1: i32) -> (i32, i32, i32, i32, i32) {
    %c0_i32 = arith.constant 0 : i32
    %c0_i32_0 = arith.constant 0 : i32
    %c0_i32_1 = arith.constant 0 : i32
    %c0_i32_2 = arith.constant 0 : i32
    return %arg0, %arg1, %c0_i32, %c0_i32_0, %c0_i32_1 : i32, i32, i32, i32, i32
  }
}

</mosaic_0001>

<llo_original>
// kernel: _forward.1
$region0: #{_forward.1}
  #allocation0 [shape = 'u32[]', space=smem, size = 0x4, offset = 0x4, fixed_abs, tag = 'smem constant byte address 0x4 - core index']
  #allocation1 [shape = 'u32[144,128]{1,0:T(1,128)}', space=vmem, size = 0x12000, scoped, tag = 'internal scratch']
  #allocation2 [shape = 'f32[1]{0:T(128)S(6)}', space=smem, size = 0x200, scoped, tag = 'scoped memory for _forward.1']
  %s0 = inlined_call_operand.vmem [shape: bf16[2,16,16,48], index: 0, kind: input, shape index: {}, may-alias: {0,1,2}]
  %s1 = inlined_call_operand.vmem [shape: bf16[2,16,16,48], index: 1, kind: input, shape index: {}, may-alias: {0,1,2}]
  %s2 = inlined_call_operand.vmem [shape: bf16[2,16,16,48], index: 2, kind: input, shape index: {}, may-alias: {0,1,2}]
  %s3 = inlined_call_operand.vmem [shape: bf16[3,48,64], index: 3, kind: input, shape index: {}]
  %s4 = inlined_call_operand.vmem [shape: f32[1,64], index: 4, kind: input, shape index: {}]
  %s5 = inlined_call_operand.<no memory space> [shape: f32[1], index: 5, kind: input, shape index: {}]
  %s6 = inlined_call_operand.vmem [shape: f32[2,16,2,16,32], index: 6, kind: output, shape index: {}]
  %s7 = sld [smem:[#allocation0]]
  $region57: #{_forward.1} parent=0
    _
  %s9 = ssub.s32 1, %s7
  %s10 = scalar_select 0, %s9, %s7
  %11 = sst [smem:[#allocation2]] %s5
  loop: start=0, step=1, limit=6
  $region2: #{_forward.1} parent=0 // loop_pre_header
    _
  $region3: #{_forward.1} parent=0 // loop_header
    %s13 = sphi 0, %s17
    %p14 = scmp.ge.s32.totalorder %s13, 6
    %s20 = sphi 0, %s32
    %s21 = sphi 0, %s28
    %s22 = sphi 0, %s20
    %s23 = sphi 0, %s21
    %s24 = sphi 0, %s22
    %s25 = sphi 0, %s23
    %s37 = sphi 0, %s39
    %s40 = sphi 0, %s37
    %s41 = sphi 0, %s40
    %s57 = sphi 0, %s41
    %s73 = sphi 0, %s75
    %s76 = sphi 0, %s73
    %s77 = sphi 0, %s76
    %s93 = sphi 0, %s77
    %s109 = sphi 0, %s111
    %s112 = sphi 0, %s109
    %s113 = sphi 0, %s112
    %s129 = sphi 0, %s113
    %s133 = sphi 0, %s133
    %s135 = sphi 0, %s133
    %s136 = sphi 0, %s135
    %s150 = sphi 0, %s136
    %s154 = sphi 0, %s154
    %s156 = sphi 0, %s154
    %s157 = sphi 0, %s156
    %s171 = sphi 0, %s157
    %s175 = sphi 0, %s175
    %s177 = sphi 0, %s175
    %s178 = sphi 0, %s177
    %s192 = sphi 0, %s178
    %s200 = sphi 0, %s202
    %s203 = sphi 0, %s200
    %s204 = sphi 0, %s203
    %s220 = sphi 0, %s204
  $region4: #{_forward.1} parent=0 // loop_header_branch
    %16 = sbr.rel (%p14) target = $region8
  $region5: #{_forward.1} parent=0 // loop_body
    %s18 = ssub.s32 %s13, 1
    %s19 = ssub.s32 %s13, 2
    %s26 = sadd.s32 1, %s21
    %p27 = scmp.ge.s32.totalorder %s26, 2
    %s28 = scalar_select %p27, 0, %s26
    %s29 = sadd.s32 1, %s20
    %s30 = scalar_select %p27, %s29, %s20
    %p31 = scmp.ge.s32.totalorder %s30, 2
    %s32 = scalar_select %p31, 0, %s30
    %s33 = ssub.s32 %s20, %s32
    %s34 = ssub.s32 %s21, %s28
    %s35 = sor.u32 %s33, %s34
    %p36 = scmp.eq.s32.totalorder %s35, 0
    %s38 = sadd.s32 %s37, 1
    %s39 = scalar_select %p36, %s37, %s38
    %p42 = pneg %p36
    %p43 = scmp.eq.s32.totalorder %s13, 3
    %p44 = por %p42, %p43
    %p45 = scmp.ne.s32.totalorder %s37, %s40
    %p46 = scmp.eq.s32.totalorder %s13, 0
    %p47 = por %p45, %p46
    %p48 = scmp.ne.s32.totalorder %s37, %s40
    %p49 = scmp.eq.s32.totalorder %s18, 3
    %p50 = por %p48, %p49
    %p51 = scmp.ne.s32.totalorder %s40, %s41
    %p52 = scmp.eq.s32.totalorder %s18, 0
    %p53 = por %p51, %p52
    %p54 = scmp.ne.s32.totalorder %s40, %s41
    %p55 = scmp.eq.s32.totalorder %s19, 3
    %p56 = por %p54, %p55
    %p58 = scmp.ne.s32.totalorder %s41, %s57
    %p59 = scmp.eq.s32.totalorder %s19, 0
    %p60 = por %p58, %p59
    %s61 = smul.u32 %s21, 8
    %s62 = ssub.s32 %s61, 1
    %p63 = scmp.gt.s32.totalorder %s62, 0
    %s64 = scalar_select %p63, %s62, 0
    %s65 = smul.u32 %s28, 8
    %s66 = ssub.s32 %s65, 1
    %p67 = scmp.gt.s32.totalorder %s66, 0
    %s68 = scalar_select %p67, %s66, 0
    %s69 = ssub.s32 %s20, %s32
    %s70 = ssub.s32 %s64, %s68
    %s71 = sor.u32 %s69, %s70
    %p72 = scmp.eq.s32.totalorder %s71, 0
    %s74 = sadd.s32 %s73, 1
    %s75 = scalar_select %p72, %s73, %s74
    %p78 = pneg %p72
    %p79 = scmp.eq.s32.totalorder %s13, 3
    %p80 = por %p78, %p79
    %p81 = scmp.ne.s32.totalorder %s73, %s76
    %p82 = scmp.eq.s32.totalorder %s13, 0
    %p83 = por %p81, %p82
    %p84 = scmp.ne.s32.totalorder %s73, %s76
    %p85 = scmp.eq.s32.totalorder %s18, 3
    %p86 = por %p84, %p85
    %p87 = scmp.ne.s32.totalorder %s76, %s77
    %p88 = scmp.eq.s32.totalorder %s18, 0
    %p89 = por %p87, %p88
    %p90 = scmp.ne.s32.totalorder %s76, %s77
    %p91 = scmp.eq.s32.totalorder %s19, 3
    %p92 = por %p90, %p91
    %p94 = scmp.ne.s32.totalorder %s77, %s93
    %p95 = scmp.eq.s32.totalorder %s19, 0
    %p96 = por %p94, %p95
    %s97 = smul.u32 %s21, 8
    %s98 = sadd.s32 %s97, 8
    %p99 = scmp.lt.s32.totalorder %s98, 15
    %s100 = scalar_select %p99, %s98, 15
    %s101 = smul.u32 %s28, 8
    %s102 = sadd.s32 %s101, 8
    %p103 = scmp.lt.s32.totalorder %s102, 15
    %s104 = scalar_select %p103, %s102, 15
    %s105 = ssub.s32 %s20, %s32
    %s106 = ssub.s32 %s100, %s104
    %s107 = sor.u32 %s105, %s106
    %p108 = scmp.eq.s32.totalorder %s107, 0
    %s110 = sadd.s32 %s109, 1
    %s111 = scalar_select %p108, %s109, %s110
    %p114 = pneg %p108
    %p115 = scmp.eq.s32.totalorder %s13, 3
    %p116 = por %p114, %p115
    %p117 = scmp.ne.s32.totalorder %s109, %s112
    %p118 = scmp.eq.s32.totalorder %s13, 0
    %p119 = por %p117, %p118
    %p120 = scmp.ne.s32.totalorder %s109, %s112
    %p121 = scmp.eq.s32.totalorder %s18, 3
    %p122 = por %p120, %p121
    %p123 = scmp.ne.s32.totalorder %s112, %s113
    %p124 = scmp.eq.s32.totalorder %s18, 0
    %p125 = por %p123, %p124
    %p126 = scmp.ne.s32.totalorder %s112, %s113
    %p127 = scmp.eq.s32.totalorder %s19, 3
    %p128 = por %p126, %p127
    %p130 = scmp.ne.s32.totalorder %s113, %s129
    %p131 = scmp.eq.s32.totalorder %s19, 0
    %p132 = por %p130, %p131
    %s134 = sadd.s32 %s133, 1
    %p137 = scmp.eq.s32.totalorder %s13, 3
    %p138 = scmp.ne.s32.totalorder %s133, %s135
    %p139 = scmp.eq.s32.totalorder %s13, 0
    %p140 = por %p138, %p139
    %p141 = scmp.ne.s32.totalorder %s133, %s135
    %p142 = scmp.eq.s32.totalorder %s18, 3
    %p143 = por %p141, %p142
    %p144 = scmp.ne.s32.totalorder %s135, %s136
    %p145 = scmp.eq.s32.totalorder %s18, 0
    %p146 = por %p144, %p145
    %p147 = scmp.ne.s32.totalorder %s135, %s136
    %p148 = scmp.eq.s32.totalorder %s19, 3
    %p149 = por %p147, %p148
    %p151 = scmp.ne.s32.totalorder %s136, %s150
    %p152 = scmp.eq.s32.totalorder %s19, 0
    %p153 = por %p151, %p152
    %s155 = sadd.s32 %s154, 1
    %p158 = scmp.eq.s32.totalorder %s13, 3
    %p159 = scmp.ne.s32.totalorder %s154, %s156
    %p160 = scmp.eq.s32.totalorder %s13, 0
    %p161 = por %p159, %p160
    %p162 = scmp.ne.s32.totalorder %s154, %s156
    %p163 = scmp.eq.s32.totalorder %s18, 3
    %p164 = por %p162, %p163
    %p165 = scmp.ne.s32.totalorder %s156, %s157
    %p166 = scmp.eq.s32.totalorder %s18, 0
    %p167 = por %p165, %p166
    %p168 = scmp.ne.s32.totalorder %s156, %s157
    %p169 = scmp.eq.s32.totalorder %s19, 3
    %p170 = por %p168, %p169
    %p172 = scmp.ne.s32.totalorder %s157, %s171
    %p173 = scmp.eq.s32.totalorder %s19, 0
    %p174 = por %p172, %p173
    %s176 = sadd.s32 %s175, 1
    %p179 = scmp.eq.s32.totalorder %s13, 3
    %p180 = scmp.ne.s32.totalorder %s175, %s177
    %p181 = scmp.eq.s32.totalorder %s13, 0
    %p182 = por %p180, %p181
    %p183 = scmp.ne.s32.totalorder %s175, %s177
    %p184 = scmp.eq.s32.totalorder %s18, 3
    %p185 = por %p183, %p184
    %p186 = scmp.ne.s32.totalorder %s177, %s178
    %p187 = scmp.eq.s32.totalorder %s18, 0
    %p188 = por %p186, %p187
    %p189 = scmp.ne.s32.totalorder %s177, %s178
    %p190 = scmp.eq.s32.totalorder %s19, 3
    %p191 = por %p189, %p190
    %p193 = scmp.ne.s32.totalorder %s178, %s192
    %p194 = scmp.eq.s32.totalorder %s19, 0
    %p195 = por %p193, %p194
    %s196 = ssub.s32 %s20, %s32
    %s197 = ssub.s32 %s21, %s28
    %s198 = sor.u32 %s196, %s197
    %p199 = scmp.eq.s32.totalorder %s198, 0
    %s201 = sadd.s32 %s200, 1
    %s202 = scalar_select %p199, %s200, %s201
    %p205 = pneg %p199
    %p206 = scmp.eq.s32.totalorder %s13, 3
    %p207 = por %p205, %p206
    %p208 = scmp.ne.s32.totalorder %s200, %s203
    %p209 = scmp.eq.s32.totalorder %s13, 0
    %p210 = por %p208, %p209
    %p211 = scmp.ne.s32.totalorder %s200, %s203
    %p212 = scmp.eq.s32.totalorder %s18, 3
    %p213 = por %p211, %p212
    %p214 = scmp.ne.s32.totalorder %s203, %s204
    %p215 = scmp.eq.s32.totalorder %s18, 0
    %p216 = por %p214, %p215
    %p217 = scmp.ne.s32.totalorder %s203, %s204
    %p218 = scmp.eq.s32.totalorder %s19, 3
    %p219 = por %p217, %p218
    %p221 = scmp.ne.s32.totalorder %s204, %s220
    %p222 = scmp.eq.s32.totalorder %s19, 0
    %p223 = por %p221, %p222
    %p224 = scmp.le.s32.totalorder 1, %s13
    %p225 = scmp.lt.s32.totalorder %s13, 5
    %p226 = pnand %p224, %p225
    %p227 = pneg %p226
    // Predicated region
    $region9: #{_forward.1} parent=5 // pred_check
      _
    $region10: #{_forward.1} parent=5 // pred_check_branch
      %229 = sbr.rel (%p226) target = $region12
    $region11: #{_forward.1} parent=5 // pred_region
      %s230 = ssub.s32 %s13, 1
      // Predicated region
      $region13: #{_forward.1} parent=11 // pred_check
        %p231 = pneg %p146
      $region14: #{_forward.1} parent=11 // pred_check_branch
        %233 = sbr.rel (%p231) target = $region16
      $region15: #{_forward.1} parent=11 // pred_region
        _
      $region16: #{_forward.1} parent=11 // pred_fallthru
        _
      // Predicated region
      $region17: #{_forward.1} parent=11 // pred_check
        %p234 = pneg %p167
      $region18: #{_forward.1} parent=11 // pred_check_branch
        %236 = sbr.rel (%p234) target = $region20
      $region19: #{_forward.1} parent=11 // pred_region
        _
      $region20: #{_forward.1} parent=11 // pred_fallthru
        _
      // Predicated region
      $region21: #{_forward.1} parent=11 // pred_check
        %p237 = pneg %p188
      $region22: #{_forward.1} parent=11 // pred_check_branch
        %239 = sbr.rel (%p237) target = $region24
      $region23: #{_forward.1} parent=11 // pred_region
        _
      $region24: #{_forward.1} parent=11 // pred_fallthru
        _
    $region12: #{_forward.1} parent=5 // pred_fallthru
      _
    %p240 = scmp.lt.s32.totalorder %s13, 4
    // Predicated region
    $region25: #{_forward.1} parent=5 // pred_check
      %p241 = pneg %p240
    $region26: #{_forward.1} parent=5 // pred_check_branch
      %243 = sbr.rel (%p241) target = $region28
    $region27: #{_forward.1} parent=5 // pred_region
      // Predicated region
      $region29: #{_forward.1} parent=27 // pred_check
        %p244 = pneg %p47
      $region30: #{_forward.1} parent=27 // pred_check_branch
        %246 = sbr.rel (%p244) target = $region32
      $region31: #{_forward.1} parent=27 // pred_region
        %s247 = smul.u32 8, %s21
        %p248 = scmp.lt.s32.totalorder %s20, 1
        %s249 = scalar_select %p248, %s20, 1
        %p250 = scmp.lt.s32.totalorder %s247, 15
        %s251 = scalar_select %p250, %s247, 15
        %s252 = smul.addr %s251, 2
        %s253 = smul.addr %s249, 32
        %s254 = sadd.s32 %s252, %s253
        %s255 = smul.addr %s254, 4
        %s256 = scalar_lea.vmem %s0, %s255
        %s257 = smul.u32 8, %s21
      $region32: #{_forward.1} parent=27 // pred_fallthru
        _
      // Predicated region
      $region33: #{_forward.1} parent=27 // pred_check
        %p258 = pneg %p83
      $region34: #{_forward.1} parent=27 // pred_check_branch
        %260 = sbr.rel (%p258) target = $region36
      $region35: #{_forward.1} parent=27 // pred_region
        %s261 = smul.u32 %s21, 8
        %s262 = ssub.s32 %s261, 1
        %p263 = scmp.gt.s32.totalorder %s262, 0
        %s264 = scalar_select %p263, %s262, 0
        %p265 = scmp.lt.s32.totalorder %s20, 1
        %s266 = scalar_select %p265, %s20, 1
        %p267 = scmp.lt.s32.totalorder %s264, 15
        %s268 = scalar_select %p267, %s264, 15
        %s269 = smul.addr %s268, 2
        %s270 = smul.addr %s266, 32
        %s271 = sadd.s32 %s269, %s270
        %s272 = smul.addr %s271, 4
        %s273 = scalar_lea.vmem %s1, %s272
        %s274 = smul.u32 %s21, 8
        %s275 = ssub.s32 %s274, 1
        %p276 = scmp.gt.s32.totalorder %s275, 0
        %s277 = scalar_select %p276, %s275, 0
      $region36: #{_forward.1} parent=27 // pred_fallthru
        _
      // Predicated region
      $region37: #{_forward.1} parent=27 // pred_check
        %p278 = pneg %p119
      $region38: #{_forward.1} parent=27 // pred_check_branch
        %280 = sbr.rel (%p278) target = $region40
      $region39: #{_forward.1} parent=27 // pred_region
        %s281 = smul.u32 %s21, 8
        %s282 = sadd.s32 %s281, 8
        %p283 = scmp.lt.s32.totalorder %s282, 15
        %s284 = scalar_select %p283, %s282, 15
        %p285 = scmp.lt.s32.totalorder %s20, 1
        %s286 = scalar_select %p285, %s20, 1
        %p287 = scmp.lt.s32.totalorder %s284, 15
        %s288 = scalar_select %p287, %s284, 15
        %s289 = smul.addr %s288, 2
        %s290 = smul.addr %s286, 32
        %s291 = sadd.s32 %s289, %s290
        %s292 = smul.addr %s291, 4
        %s293 = scalar_lea.vmem %s2, %s292
        %s294 = smul.u32 %s21, 8
        %s295 = sadd.s32 %s294, 8
        %p296 = scmp.lt.s32.totalorder %s295, 15
        %s297 = scalar_select %p296, %s295, 15
      $region40: #{_forward.1} parent=27 // pred_fallthru
        _
    $region28: #{_forward.1} parent=5 // pred_fallthru
      _
    %p298 = scmp.le.s32.totalorder 1, %s13
    %p299 = scmp.lt.s32.totalorder %s13, 5
    %p300 = pnand %p298, %p299
    %p301 = pneg %p300
    // Predicated region
    $region41: #{_forward.1} parent=5 // pred_check
      _
    $region42: #{_forward.1} parent=5 // pred_check_branch
      %303 = sbr.rel (%p300) target = $region44
    $region43: #{_forward.1} parent=5 // pred_region
      %s304 = ssub.s32 %s13, 1
      %s305 = smul.u32 8, %s23
      %p306 = scmp.lt.s32.totalorder %s22, 1
      %s307 = scalar_select %p306, %s22, 1
      %p308 = scmp.lt.s32.totalorder %s305, 15
      %s309 = scalar_select %p308, %s305, 15
      %s310 = smul.addr %s309, 2
      %s311 = smul.addr %s307, 32
      %s312 = sadd.s32 %s310, %s311
      %s313 = smul.addr %s312, 4
      %s314 = scalar_lea.vmem %s0, %s313
      %p315 = pneg %p53
      %p316 = pneg %p50
      %s317 = smul.u32 %s23, 8
      %s318 = ssub.s32 %s317, 1
      %p319 = scmp.gt.s32.totalorder %s318, 0
      %s320 = scalar_select %p319, %s318, 0
      %p321 = scmp.lt.s32.totalorder %s22, 1
      %s322 = scalar_select %p321, %s22, 1
      %p323 = scmp.lt.s32.totalorder %s320, 15
      %s324 = scalar_select %p323, %s320, 15
      %s325 = smul.addr %s324, 2
      %s326 = smul.addr %s322, 32
      %s327 = sadd.s32 %s325, %s326
      %s328 = smul.addr %s327, 4
      %s329 = scalar_lea.vmem %s1, %s328
      %p330 = pneg %p89
      %p331 = pneg %p86
      %s332 = smul.u32 %s23, 8
      %s333 = sadd.s32 %s332, 8
      %p334 = scmp.lt.s32.totalorder %s333, 15
      %s335 = scalar_select %p334, %s333, 15
      %p336 = scmp.lt.s32.totalorder %s22, 1
      %s337 = scalar_select %p336, %s22, 1
      %p338 = scmp.lt.s32.totalorder %s335, 15
      %s339 = scalar_select %p338, %s335, 15
      %s340 = smul.addr %s339, 2
      %s341 = smul.addr %s337, 32
      %s342 = sadd.s32 %s340, %s341
      %s343 = smul.addr %s342, 4
      %s344 = scalar_lea.vmem %s2, %s343
      %p345 = pneg %p125
      %p346 = pneg %p122
      %p347 = pneg %p146
      %p348 = pneg %p143
      %p349 = pneg %p167
      %p350 = pneg %p164
      %p351 = pneg %p188
      %p352 = pneg %p185
      %p353 = pneg %p216
      %p354 = pneg %p213
      %s355 = smul.u32 8, %s23
      %p356 = scmp.lt.s32.totalorder %s22, 1
      %s357 = scalar_select %p356, %s22, 1
      %p358 = scmp.lt.s32.totalorder %s355, 15
      %s359 = scalar_select %p358, %s355, 15
      %s360 = smul.addr %s359, 4
      %s361 = smul.addr %s357, 64
      %s362 = sadd.s32 %s360, %s361
      %s363 = smul.addr %s362, 8
      %s364 = scalar_lea.vmem %s6, %s363
      %s365 = smul.u32 8, %s23
      %p366 = scmp.lt.s32.totalorder %s22, 1
      %s367 = scalar_select %p366, %s22, 1
      %p368 = scmp.lt.s32.totalorder %s365, 15
      %s369 = scalar_select %p368, %s365, 15
      %s370 = smul.addr %s369, 2
      %s371 = smul.addr %s367, 32
      %s372 = sadd.s32 %s370, %s371
      %s373 = smul.addr %s372, 4
      %s374 = scalar_lea.vmem %s0, %s373
      %s375 = smul.u32 8, %s23
      %s376 = smul.u32 %s23, 8
      %s377 = ssub.s32 %s376, 1
      %p378 = scmp.gt.s32.totalorder %s377, 0
      %s379 = scalar_select %p378, %s377, 0
      %p380 = scmp.lt.s32.totalorder %s22, 1
      %s381 = scalar_select %p380, %s22, 1
      %p382 = scmp.lt.s32.totalorder %s379, 15
      %s383 = scalar_select %p382, %s379, 15
      %s384 = smul.addr %s383, 2
      %s385 = smul.addr %s381, 32
      %s386 = sadd.s32 %s384, %s385
      %s387 = smul.addr %s386, 4
      %s388 = scalar_lea.vmem %s1, %s387
      %s389 = smul.u32 %s23, 8
      %s390 = ssub.s32 %s389, 1
      %p391 = scmp.gt.s32.totalorder %s390, 0
      %s392 = scalar_select %p391, %s390, 0
      %s393 = smul.u32 %s23, 8
      %s394 = sadd.s32 %s393, 8
      %p395 = scmp.lt.s32.totalorder %s394, 15
      %s396 = scalar_select %p395, %s394, 15
      %p397 = scmp.lt.s32.totalorder %s22, 1
      %s398 = scalar_select %p397, %s22, 1
      %p399 = scmp.lt.s32.totalorder %s396, 15
      %s400 = scalar_select %p399, %s396, 15
      %s401 = smul.addr %s400, 2
      %s402 = smul.addr %s398, 32
      %s403 = sadd.s32 %s401, %s402
      %s404 = smul.addr %s403, 4
      %s405 = scalar_lea.vmem %s2, %s404
      %s406 = smul.u32 %s23, 8
      %s407 = sadd.s32 %s406, 8
      %p408 = scmp.lt.s32.totalorder %s407, 15
      %s409 = scalar_select %p408, %s407, 15
      %s410 = smul.u32 8, %s23
      %p411 = scmp.lt.s32.totalorder %s22, 1
      %s412 = scalar_select %p411, %s22, 1
      %p413 = scmp.lt.s32.totalorder %s410, 15
      %s414 = scalar_select %p413, %s410, 15
      %s415 = smul.addr %s414, 4
      %s416 = smul.addr %s412, 64
      %s417 = sadd.s32 %s415, %s416
      %s418 = smul.addr %s417, 8
      %s419 = scalar_lea.vmem %s6, %s418
      %s420 = smul.u32 8, %s23
      %p422 = scmp.gt.s32.totalorder %s23, 0
      %v423 = vld [vmem:[%s388] sm:$0xf]
      %v424 = vld [vmem:[%s388 + $0x4] sm:$0xf]
      %s425 = scalar_select %p422, 1, 0
      %v426 = vstv %s425
      %vm427 = vcmp.eq.s32.totalorder %v426, 1
      %v428 = vsel %vm427, %v423, 0
      %v429 = vsel %vm427, %v424, 0
      %p430 = scmp.lt.s32.totalorder %s23, 1
      %v431 = vld [vmem:[%s405] sm:$0xf]
      %v432 = vld [vmem:[%s405 + $0x4] sm:$0xf]
      %s433 = scalar_select %p430, 1, 0
      %v434 = vstv %s433
      %vm435 = vcmp.eq.s32.totalorder %v434, 1
      %v436 = vsel %vm435, %v431, 0
      %v437 = vsel %vm435, %v432, 0
      %v438 = vld [vmem:[%s374] sm:$0xf]
      %v439 = vld [vmem:[%s374 + $0x4] sm:$0xf]
      %v440 = vld [vmem:[%s374 + $0x8] sm:$0xf]
      %v441 = vld [vmem:[%s374 + $0xc] sm:$0xf]
      %v442 = vld [vmem:[%s374 + $0x10] sm:$0xf]
      %v443 = vld [vmem:[%s374 + $0x14] sm:$0xf]
      %v444 = vld [vmem:[%s374 + $0x18] sm:$0xf]
      %v445 = vld [vmem:[%s374 + $0x1c] sm:$0xf]
      %v446 = vld [vmem:[%s374 + $0x20] sm:$0xf]
      %v447 = vld [vmem:[%s374 + $0x24] sm:$0xf]
      %v448 = vld [vmem:[%s374 + $0x28] sm:$0xf]
      %v449 = vld [vmem:[%s374 + $0x2c] sm:$0xf]
      %v450 = vld [vmem:[%s374 + $0x30] sm:$0xf]
      %v451 = vld [vmem:[%s374 + $0x34] sm:$0xf]
      %v452 = vld [vmem:[%s374 + $0x38] sm:$0xf]
      %v453 = vld [vmem:[%s374 + $0x3c] sm:$0xf]
      %v454 = vld [vmem:[%s3] sm:$0xf]
      %v455 = vld [vmem:[%s3 + $0x4] sm:$0xf]
      %v456 = vld [vmem:[%s3 + $0x8] sm:$0xf]
      %v457 = vld [vmem:[%s3 + $0xc] sm:$0xf]
      %v458 = vld [vmem:[%s3 + $0x10] sm:$0xf]
      %v459 = vld [vmem:[%s3 + $0x14] sm:$0xf]
      %s460 = scalar_lea.vmem %s3, 24
      %v461 = vld [vmem:[%s460] sm:$0xf]
      %v462 = vld [vmem:[%s460 + $0x4] sm:$0xf]
      %v463 = vld [vmem:[%s460 + $0x8] sm:$0xf]
      %v464 = vld [vmem:[%s460 + $0xc] sm:$0xf]
      %v465 = vld [vmem:[%s460 + $0x10] sm:$0xf]
      %v466 = vld [vmem:[%s460 + $0x14] sm:$0xf]
      %v483 = vunpack.c.l.b16 %v438
      %v484 = vunpack.c.l.b16 %v439
      %v485 = vunpack.c.l.b16 %v440
      %v486 = vunpack.c.l.b16 %v441
      %v487 = vunpack.c.l.b16 %v442
      %v488 = vunpack.c.l.b16 %v443
      %v489 = vunpack.c.l.b16 %v444
      %v490 = vunpack.c.l.b16 %v445
      %v491 = vunpack.c.l.b16 %v446
      %v492 = vunpack.c.l.b16 %v447
      %v493 = vunpack.c.l.b16 %v448
      %v494 = vunpack.c.l.b16 %v449
      %v495 = vunpack.c.l.b16 %v450
      %v496 = vunpack.c.l.b16 %v451
      %v497 = vunpack.c.l.b16 %v452
      %v498 = vunpack.c.l.b16 %v453
      %v499 = vpack.c.b16 %v484, %v483
      %v500 = vpack.c.b16 %v486, %v485
      %v501 = vpack.c.b16 %v488, %v487
      %v502 = vpack.c.b16 %v490, %v489
      %v503 = vpack.c.b16 %v492, %v491
      %v504 = vpack.c.b16 %v494, %v493
      %v505 = vpack.c.b16 %v496, %v495
      %v506 = vpack.c.b16 %v498, %v497
      %v513 = vunpack.c.l.b16 %v461
      %v514 = vunpack.c.l.b16 %v462
      %v515 = vunpack.c.l.b16 %v463
      %v516 = vunpack.c.l.b16 %v464
      %v517 = vunpack.c.l.b16 %v465
      %v518 = vunpack.c.l.b16 %v466
      %v519 = vpack.c.b16 %v514, %v513
      %v520 = vpack.c.b16 %v516, %v515
      %v521 = vpack.c.b16 %v518, %v517
      %vm525 = vcmask 392192
      %v527 = vsel %vm525, %v499, 0
      %v530 = vsel %vm525, %v500, 0
      %v533 = vsel %vm525, %v501, 0
      %v536 = vsel %vm525, %v502, 0
      %v539 = vsel %vm525, %v503, 0
      %v542 = vsel %vm525, %v504, 0
      %v545 = vsel %vm525, %v505, 0
      %v548 = vsel %vm525, %v506, 0
      %550 = vmatprep.subr.bf16.mxu0 0
      %551 = vmatpush1.bf16.msra.mxu0 %v519
      %552 = vmatprep.subr.bf16.mxu0 0
      %553 = vmatpush1.bf16.msra.mxu0 %v520
      %554 = vmatprep.subr.bf16.mxu0 0
      %555 = vmatpush1.bf16.msra.mxu0 %v521
      %556 = vmatprep.subr.bf16.mxu0 0
      %557 = vmatpush1.bf16.msra.mxu0 0
      %558 = vmatprep.subr.bf16.mxu0 0
      %559 = vmatpush1.bf16.msra.mxu0 0
      %560 = vmatprep.subr.bf16.mxu0 0
      %561 = vmatpush1.bf16.msra.mxu0 0
      %562 = vmatprep.subr.bf16.mxu0 0
      %563 = vmatpush1.bf16.msra.mxu0 0
      %564 = vmatprep.subr.bf16.mxu0 0
      %565 = vmatpush1.bf16.msra.mxu0 0
      %566 = vmatprep.subr.bf16.mxu0 0
      %567 = vmatpush1.bf16.msra.mxu0 0
      %568 = vmatprep.subr.bf16.mxu0 0
      %569 = vmatpush1.bf16.msra.mxu0 0
      %570 = vmatprep.subr.bf16.mxu0 0
      %571 = vmatpush1.bf16.msra.mxu0 0
      %572 = vmatprep.subr.bf16.mxu0 0
      %573 = vmatpush1.bf16.msra.mxu0 0
      %574 = vmatprep.subr.bf16.mxu0 0
      %575 = vmatpush1.bf16.msra.mxu0 0
      %576 = vmatprep.subr.bf16.mxu0 0
      %577 = vmatpush1.bf16.msra.mxu0 0
      %578 = vmatprep.subr.bf16.mxu0 0
      %579 = vmatpush1.bf16.msra.mxu0 0
      %580 = vmatprep.subr.bf16.mxu0 0
      %581 = vmatpush1.bf16.msra.mxu0 0
      %582 = vmatprep.mubr.bf16.mxu0 0
      %583 = vmatmul.mubr.bf16.gmra.mrb[0].mxu0 %v527
      %v584 = vpop.f32.mrb[0].mxu0
      %v585 = vadd.f32 0.0, %v584
      %v586 = vpop.f32.mrb[0].mxu0
      %v587 = vpop.f32.mrb[0].mxu0
      %v588 = vadd.f32 0.0, %v587
      %v589 = vpop.f32.mrb[0].mxu0
      %590 = vmatprep.mubr.bf16.mxu0 0
      %591 = vmatmul.mubr.bf16.gmra.mrb[0].mxu0 %v530
      %v592 = vpop.f32.mrb[0].mxu0
      %v593 = vadd.f32 0.0, %v592
      %v594 = vpop.f32.mrb[0].mxu0
      %v595 = vpop.f32.mrb[0].mxu0
      %v596 = vadd.f32 0.0, %v595
      %v597 = vpop.f32.mrb[0].mxu0
      %598 = vmatprep.mubr.bf16.mxu0 0
      %599 = vmatmul.mubr.bf16.gmra.mrb[0].mxu0 %v533
      %v600 = vpop.f32.mrb[0].mxu0
      %v601 = vadd.f32 0.0, %v600
      %v602 = vpop.f32.mrb[0].mxu0
      %v603 = vpop.f32.mrb[0].mxu0
      %v604 = vadd.f32 0.0, %v603
      %v605 = vpop.f32.mrb[0].mxu0
      %606 = vmatprep.mubr.bf16.mxu0 0
      %607 = vmatmul.mubr.bf16.gmra.mrb[0].mxu0 %v536
      %v608 = vpop.f32.mrb[0].mxu0
      %v609 = vadd.f32 0.0, %v608
      %v610 = vpop.f32.mrb[0].mxu0
      %v611 = vpop.f32.mrb[0].mxu0
      %v612 = vadd.f32 0.0, %v611
      %v613 = vpop.f32.mrb[0].mxu0
      %614 = vmatprep.mubr.bf16.mxu0 0
      %615 = vmatmul.mubr.bf16.gmra.mrb[0].mxu0 %v539
      %v616 = vpop.f32.mrb[0].mxu0
      %v617 = vadd.f32 0.0, %v616
      %v618 = vpop.f32.mrb[0].mxu0
      %v619 = vpop.f32.mrb[0].mxu0
      %v620 = vadd.f32 0.0, %v619
      %v621 = vpop.f32.mrb[0].mxu0
      %622 = vmatprep.mubr.bf16.mxu0 0
      %623 = vmatmul.mubr.bf16.gmra.mrb[0].mxu0 %v542
      %v624 = vpop.f32.mrb[0].mxu0
      %v625 = vadd.f32 0.0, %v624
      %v626 = vpop.f32.mrb[0].mxu0
      %v627 = vpop.f32.mrb[0].mxu0
      %v628 = vadd.f32 0.0, %v627
      %v629 = vpop.f32.mrb[0].mxu0
      %630 = vmatprep.mubr.bf16.mxu0 0
      %631 = vmatmul.mubr.bf16.gmra.mrb[0].mxu0 %v545
      %v632 = vpop.f32.mrb[0].mxu0
      %v633 = vadd.f32 0.0, %v632
      %v634 = vpop.f32.mrb[0].mxu0
      %v635 = vpop.f32.mrb[0].mxu0
      %v636 = vadd.f32 0.0, %v635
      %v637 = vpop.f32.mrb[0].mxu0
      %638 = vmatprep.mubr.bf16.mxu0 0
      %639 = vmatmul.mubr.bf16.gmra.mrb[0].mxu0 %v548
      %v640 = vpop.f32.mrb[0].mxu0
      %v641 = vadd.f32 0.0, %v640
      %v642 = vpop.f32.mrb[0].mxu0
      %v643 = vpop.f32.mrb[0].mxu0
      %v644 = vadd.f32 0.0, %v643
      %v645 = vpop.f32.mrb[0].mxu0
      %646 = vdwg.mxu0
      %v649 = vunpack.c.l.b16 %v428
      %v650 = vunpack.c.l.b16 %v429
      %v651 = vpack.c.b16 %v650, %v649
      %v658 = vunpack.c.l.b16 %v454
      %v659 = vunpack.c.l.b16 %v455
      %v660 = vunpack.c.l.b16 %v456
      %v661 = vunpack.c.l.b16 %v457
      %v662 = vunpack.c.l.b16 %v458
      %v663 = vunpack.c.l.b16 %v459
      %v664 = vpack.c.b16 %v659, %v658
      %v665 = vpack.c.b16 %v661, %v660
      %v666 = vpack.c.b16 %v663, %v662
      %v671 = vsel %vm525, %v651, 0
      %673 = vmatprep.subr.bf16.mxu0 0
      %674 = vmatpush1.bf16.msra.mxu0 %v664
      %675 = vmatprep.subr.bf16.mxu0 0
      %676 = vmatpush1.bf16.msra.mxu0 %v665
      %677 = vmatprep.subr.bf16.mxu0 0
      %678 = vmatpush1.bf16.msra.mxu0 %v666
      %679 = vmatprep.subr.bf16.mxu0 0
      %680 = vmatpush1.bf16.msra.mxu0 0
      %681 = vmatprep.subr.bf16.mxu0 0
      %682 = vmatpush1.bf16.msra.mxu0 0
      %683 = vmatprep.subr.bf16.mxu0 0
      %684 = vmatpush1.bf16.msra.mxu0 0
      %685 = vmatprep.subr.bf16.mxu0 0
      %686 = vmatpush1.bf16.msra.mxu0 0
      %687 = vmatprep.subr.bf16.mxu0 0
      %688 = vmatpush1.bf16.msra.mxu0 0
      %689 = vmatprep.subr.bf16.mxu0 0
      %690 = vmatpush1.bf16.msra.mxu0 0
      %691 = vmatprep.subr.bf16.mxu0 0
      %692 = vmatpush1.bf16.msra.mxu0 0
      %693 = vmatprep.subr.bf16.mxu0 0
      %694 = vmatpush1.bf16.msra.mxu0 0
      %695 = vmatprep.subr.bf16.mxu0 0
      %696 = vmatpush1.bf16.msra.mxu0 0
      %697 = vmatprep.subr.bf16.mxu0 0
      %698 = vmatpush1.bf16.msra.mxu0 0
      %699 = vmatprep.subr.bf16.mxu0 0
      %700 = vmatpush1.bf16.msra.mxu0 0
      %701 = vmatprep.subr.bf16.mxu0 0
      %702 = vmatpush1.bf16.msra.mxu0 0
      %703 = vmatprep.subr.bf16.mxu0 0
      %704 = vmatpush1.bf16.msra.mxu0 0
      %705 = vmatprep.mubr.bf16.mxu0 0
      %706 = vmatmul.mubr.bf16.gmra.mrb[0].mxu0 %v671
      %v707 = vpop.f32.mrb[0].mxu0
      %v708 = vadd.f32 %v585, %v707
      %v709 = vpop.f32.mrb[0].mxu0
      %v710 = vpop.f32.mrb[0].mxu0
      %v711 = vadd.f32 %v588, %v710
      %v712 = vpop.f32.mrb[0].mxu0
      %713 = vmatprep.mubr.bf16.mxu0 0
      %714 = vmatmul.mubr.bf16.gmra.mrb[0].mxu0 %v527
      %v715 = vpop.f32.mrb[0].mxu0
      %v716 = vadd.f32 %v593, %v715
      %v717 = vpop.f32.mrb[0].mxu0
      %v718 = vpop.f32.mrb[0].mxu0
      %v719 = vadd.f32 %v596, %v718
      %v720 = vpop.f32.mrb[0].mxu0
      %721 = vmatprep.mubr.bf16.mxu0 0
      %722 = vmatmul.mubr.bf16.gmra.mrb[0].mxu0 %v530
      %v723 = vpop.f32.mrb[0].mxu0
      %v724 = vadd.f32 %v601, %v723
      %v725 = vpop.f32.mrb[0].mxu0
      %v726 = vpop.f32.mrb[0].mxu0
      %v727 = vadd.f32 %v604, %v726
      %v728 = vpop.f32.mrb[0].mxu0
      %729 = vmatprep.mubr.bf16.mxu0 0
      %730 = vmatmul.mubr.bf16.gmra.mrb[0].mxu0 %v533
      %v731 = vpop.f32.mrb[0].mxu0
      %v732 = vadd.f32 %v609, %v731
      %v733 = vpop.f32.mrb[0].mxu0
      %v734 = vpop.f32.mrb[0].mxu0
      %v735 = vadd.f32 %v612, %v734
      %v736 = vpop.f32.mrb[0].mxu0
      %737 = vmatprep.mubr.bf16.mxu0 0
      %738 = vmatmul.mubr.bf16.gmra.mrb[0].mxu0 %v536
      %v739 = vpop.f32.mrb[0].mxu0
      %v740 = vadd.f32 %v617, %v739
      %v741 = vpop.f32.mrb[0].mxu0
      %v742 = vpop.f32.mrb[0].mxu0
      %v743 = vadd.f32 %v620, %v742
      %v744 = vpop.f32.mrb[0].mxu0
      %745 = vmatprep.mubr.bf16.mxu0 0
      %746 = vmatmul.mubr.bf16.gmra.mrb[0].mxu0 %v539
      %v747 = vpop.f32.mrb[0].mxu0
      %v748 = vadd.f32 %v625, %v747
      %v749 = vpop.f32.mrb[0].mxu0
      %v750 = vpop.f32.mrb[0].mxu0
      %v751 = vadd.f32 %v628, %v750
      %v752 = vpop.f32.mrb[0].mxu0
      %753 = vmatprep.mubr.bf16.mxu0 0
      %754 = vmatmul.mubr.bf16.gmra.mrb[0].mxu0 %v542
      %v755 = vpop.f32.mrb[0].mxu0
      %v756 = vadd.f32 %v633, %v755
      %v757 = vpop.f32.mrb[0].mxu0
      %v758 = vpop.f32.mrb[0].mxu0
      %v759 = vadd.f32 %v636, %v758
      %v760 = vpop.f32.mrb[0].mxu0
      %761 = vmatprep.mubr.bf16.mxu0 0
      %762 = vmatmul.mubr.bf16.gmra.mrb[0].mxu0 %v545
      %v763 = vpop.f32.mrb[0].mxu0
      %v764 = vadd.f32 %v641, %v763
      %v765 = vpop.f32.mrb[0].mxu0
      %v766 = vpop.f32.mrb[0].mxu0
      %v767 = vadd.f32 %v644, %v766
      %v768 = vpop.f32.mrb[0].mxu0
      %769 = vdwg.mxu0
      %s770 = scalar_lea.vmem %s3, 48
      %v771 = vld [vmem:[%s770] sm:$0xf]
      %v772 = vld [vmem:[%s770 + $0x4] sm:$0xf]
      %v773 = vld [vmem:[%s770 + $0x8] sm:$0xf]
      %v774 = vld [vmem:[%s770 + $0xc] sm:$0xf]
      %v775 = vld [vmem:[%s770 + $0x10] sm:$0xf]
      %v776 = vld [vmem:[%s770 + $0x14] sm:$0xf]
      %v779 = vunpack.c.l.b16 %v436
      %v780 = vunpack.c.l.b16 %v437
      %v781 = vpack.c.b16 %v780, %v779
      %v788 = vunpack.c.l.b16 %v771
      %v789 = vunpack.c.l.b16 %v772
      %v790 = vunpack.c.l.b16 %v773
      %v791 = vunpack.c.l.b16 %v774
      %v792 = vunpack.c.l.b16 %v775
      %v793 = vunpack.c.l.b16 %v776
      %v794 = vpack.c.b16 %v789, %v788
      %v795 = vpack.c.b16 %v791, %v790
      %v796 = vpack.c.b16 %v793, %v792
      %v801 = vsel %vm525, %v781, 0
      %803 = vmatprep.subr.bf16.mxu0 0
      %804 = vmatpush1.bf16.msra.mxu0 %v794
      %805 = vmatprep.subr.bf16.mxu0 0
      %806 = vmatpush1.bf16.msra.mxu0 %v795
      %807 = vmatprep.subr.bf16.mxu0 0
      %808 = vmatpush1.bf16.msra.mxu0 %v796
      %809 = vmatprep.subr.bf16.mxu0 0
      %810 = vmatpush1.bf16.msra.mxu0 0
      %811 = vmatprep.subr.bf16.mxu0 0
      %812 = vmatpush1.bf16.msra.mxu0 0
      %813 = vmatprep.subr.bf16.mxu0 0
      %814 = vmatpush1.bf16.msra.mxu0 0
      %815 = vmatprep.subr.bf16.mxu0 0
      %816 = vmatpush1.bf16.msra.mxu0 0
      %817 = vmatprep.subr.bf16.mxu0 0
      %818 = vmatpush1.bf16.msra.mxu0 0
      %819 = vmatprep.subr.bf16.mxu0 0
      %820 = vmatpush1.bf16.msra.mxu0 0
      %821 = vmatprep.subr.bf16.mxu0 0
      %822 = vmatpush1.bf16.msra.mxu0 0
      %823 = vmatprep.subr.bf16.mxu0 0
      %824 = vmatpush1.bf16.msra.mxu0 0
      %825 = vmatprep.subr.bf16.mxu0 0
      %826 = vmatpush1.bf16.msra.mxu0 0
      %827 = vmatprep.subr.bf16.mxu0 0
      %828 = vmatpush1.bf16.msra.mxu0 0
      %829 = vmatprep.subr.bf16.mxu0 0
      %830 = vmatpush1.bf16.msra.mxu0 0
      %831 = vmatprep.subr.bf16.mxu0 0
      %832 = vmatpush1.bf16.msra.mxu0 0
      %833 = vmatprep.subr.bf16.mxu0 0
      %834 = vmatpush1.bf16.msra.mxu0 0
      %835 = vmatprep.mubr.bf16.mxu0 0
      %836 = vmatmul.mubr.bf16.gmra.mrb[0].mxu0 %v530
      %v837 = vpop.f32.mrb[0].mxu0
      %v838 = vadd.f32 0.0, %v837
      %v839 = vpop.f32.mrb[0].mxu0
      %v840 = vpop.f32.mrb[0].mxu0
      %v841 = vadd.f32 0.0, %v840
      %v842 = vpop.f32.mrb[0].mxu0
      %843 = vmatprep.mubr.bf16.mxu0 0
      %844 = vmatmul.mubr.bf16.gmra.mrb[0].mxu0 %v533
      %v845 = vpop.f32.mrb[0].mxu0
      %v846 = vadd.f32 0.0, %v845
      %v847 = vpop.f32.mrb[0].mxu0
      %v848 = vpop.f32.mrb[0].mxu0
      %v849 = vadd.f32 0.0, %v848
      %v850 = vpop.f32.mrb[0].mxu0
      %851 = vmatprep.mubr.bf16.mxu0 0
      %852 = vmatmul.mubr.bf16.gmra.mrb[0].mxu0 %v536
      %v853 = vpop.f32.mrb[0].mxu0
      %v854 = vadd.f32 0.0, %v853
      %v855 = vpop.f32.mrb[0].mxu0
      %v856 = vpop.f32.mrb[0].mxu0
      %v857 = vadd.f32 0.0, %v856
      %v858 = vpop.f32.mrb[0].mxu0
      %859 = vmatprep.mubr.bf16.mxu0 0
      %860 = vmatmul.mubr.bf16.gmra.mrb[0].mxu0 %v539
      %v861 = vpop.f32.mrb[0].mxu0
      %v862 = vadd.f32 0.0, %v861
      %v863 = vpop.f32.mrb[0].mxu0
      %v864 = vpop.f32.mrb[0].mxu0
      %v865 = vadd.f32 0.0, %v864
      %v866 = vpop.f32.mrb[0].mxu0
      %867 = vmatprep.mubr.bf16.mxu0 0
      %868 = vmatmul.mubr.bf16.gmra.mrb[0].mxu0 %v542
      %v869 = vpop.f32.mrb[0].mxu0
      %v870 = vadd.f32 0.0, %v869
      %v871 = vpop.f32.mrb[0].mxu0
      %v872 = vpop.f32.mrb[0].mxu0
      %v873 = vadd.f32 0.0, %v872
      %v874 = vpop.f32.mrb[0].mxu0
      %875 = vmatprep.mubr.bf16.mxu0 0
      %876 = vmatmul.mubr.bf16.gmra.mrb[0].mxu0 %v545
      %v877 = vpop.f32.mrb[0].mxu0
      %v878 = vadd.f32 0.0, %v877
      %v879 = vpop.f32.mrb[0].mxu0
      %v880 = vpop.f32.mrb[0].mxu0
      %v881 = vadd.f32 0.0, %v880
      %v882 = vpop.f32.mrb[0].mxu0
      %883 = vmatprep.mubr.bf16.mxu0 0
      %884 = vmatmul.mubr.bf16.gmra.mrb[0].mxu0 %v548
      %v885 = vpop.f32.mrb[0].mxu0
      %v886 = vadd.f32 0.0, %v885
      %v887 = vpop.f32.mrb[0].mxu0
      %v888 = vpop.f32.mrb[0].mxu0
      %v889 = vadd.f32 0.0, %v888
      %v890 = vpop.f32.mrb[0].mxu0
      %891 = vmatprep.mubr.bf16.mxu0 0
      %892 = vmatmul.mubr.bf16.gmra.mrb[0].mxu0 %v801
      %v893 = vpop.f32.mrb[0].mxu0
      %v894 = vadd.f32 0.0, %v893
      %v895 = vpop.f32.mrb[0].mxu0
      %v896 = vpop.f32.mrb[0].mxu0
      %v897 = vadd.f32 0.0, %v896
      %v898 = vpop.f32.mrb[0].mxu0
      %899 = vdwg.mxu0
      %v900 = vadd.f32 %v708, %v838
      %v901 = vadd.f32 %v711, %v841
      %v902 = vadd.f32 %v716, %v846
      %v903 = vadd.f32 %v719, %v849
      %v904 = vadd.f32 %v724, %v854
      %v905 = vadd.f32 %v727, %v857
      %v906 = vadd.f32 %v732, %v862
      %v907 = vadd.f32 %v735, %v865
      %v908 = vadd.f32 %v740, %v870
      %v909 = vadd.f32 %v743, %v873
      %v910 = vadd.f32 %v748, %v878
      %v911 = vadd.f32 %v751, %v881
      %v912 = vadd.f32 %v756, %v886
      %v913 = vadd.f32 %v759, %v889
      %v914 = vadd.f32 %v764, %v894
      %v915 = vadd.f32 %v767, %v897
      %v916 = vld [vmem:[%s4] sm:$0x1]
      %v918 = vlaneseq
      %v919 = vshrl.u32 %v918, 7
      %v920 = vsub.s32 0, %v919
      %v921 = vrot.slane %v916, %v920
      %v923 = vadd.f32 %v900, %v921
      %v924 = vadd.f32 %v901, %v921
      %v925 = vadd.f32 %v902, %v921
      %v926 = vadd.f32 %v903, %v921
      %v927 = vadd.f32 %v904, %v921
      %v928 = vadd.f32 %v905, %v921
      %v929 = vadd.f32 %v906, %v921
      %v930 = vadd.f32 %v907, %v921
      %v931 = vadd.f32 %v908, %v921
      %v932 = vadd.f32 %v909, %v921
      %v933 = vadd.f32 %v910, %v921
      %v934 = vadd.f32 %v911, %v921
      %v935 = vadd.f32 %v912, %v921
      %v936 = vadd.f32 %v913, %v921
      %v937 = vadd.f32 %v914, %v921
      %v938 = vadd.f32 %v915, %v921
      %s939 = sld [smem:[#allocation2]]
      %vm940 = vcmp.ge.f32.partialorder %v923, 0.0
      %vm941 = vcmp.ge.f32.partialorder %v924, 0.0
      %vm942 = vcmp.ge.f32.partialorder %v925, 0.0
      %vm943 = vcmp.ge.f32.partialorder %v926, 0.0
      %vm944 = vcmp.ge.f32.partialorder %v927, 0.0
      %vm945 = vcmp.ge.f32.partialorder %v928, 0.0
      %vm946 = vcmp.ge.f32.partialorder %v929, 0.0
      %vm947 = vcmp.ge.f32.partialorder %v930, 0.0
      %vm948 = vcmp.ge.f32.partialorder %v931, 0.0
      %vm949 = vcmp.ge.f32.partialorder %v932, 0.0
      %vm950 = vcmp.ge.f32.partialorder %v933, 0.0
      %vm951 = vcmp.ge.f32.partialorder %v934, 0.0
      %vm952 = vcmp.ge.f32.partialorder %v935, 0.0
      %vm953 = vcmp.ge.f32.partialorder %v936, 0.0
      %vm954 = vcmp.ge.f32.partialorder %v937, 0.0
      %vm955 = vcmp.ge.f32.partialorder %v938, 0.0
      %v956 = vstv %s939
      %v957 = vmul.f32 %v956, %v923
      %v958 = vmul.f32 %v956, %v924
      %v959 = vmul.f32 %v956, %v925
      %v960 = vmul.f32 %v956, %v926
      %v961 = vmul.f32 %v956, %v927
      %v962 = vmul.f32 %v956, %v928
      %v963 = vmul.f32 %v956, %v929
      %v964 = vmul.f32 %v956, %v930
      %v965 = vmul.f32 %v956, %v931
      %v966 = vmul.f32 %v956, %v932
      %v967 = vmul.f32 %v956, %v933
      %v968 = vmul.f32 %v956, %v934
      %v969 = vmul.f32 %v956, %v935
      %v970 = vmul.f32 %v956, %v936
      %v971 = vmul.f32 %v956, %v937
      %v972 = vmul.f32 %v956, %v938
      %v973 = vsel %vm940, %v923, %v957
      %v974 = vsel %vm941, %v924, %v958
      %v975 = vsel %vm942, %v925, %v959
      %v976 = vsel %vm943, %v926, %v960
      %v977 = vsel %vm944, %v927, %v961
      %v978 = vsel %vm945, %v928, %v962
      %v979 = vsel %vm946, %v929, %v963
      %v980 = vsel %vm947, %v930, %v964
      %v981 = vsel %vm948, %v931, %v965
      %v982 = vsel %vm949, %v932, %v966
      %v983 = vsel %vm950, %v933, %v967
      %v984 = vsel %vm951, %v934, %v968
      %v985 = vsel %vm952, %v935, %v969
      %v986 = vsel %vm953, %v936, %v970
      %v987 = vsel %vm954, %v937, %v971
      %v988 = vsel %vm955, %v938, %v972
      %vm989 = vcmask 261120
      %990 = vst.msk [vmem:[%s419] sm:$0xff] %vm989, %v973
      %991 = vst.msk [vmem:[%s419 + $0x8] sm:$0xff] %vm989, %v974
      %992 = vst.msk [vmem:[%s419 + $0x20] sm:$0xff] %vm989, %v975
      %993 = vst.msk [vmem:[%s419 + $0x28] sm:$0xff] %vm989, %v976
      %994 = vst.msk [vmem:[%s419 + $0x40] sm:$0xff] %vm989, %v977
      %995 = vst.msk [vmem:[%s419 + $0x48] sm:$0xff] %vm989, %v978
      %996 = vst.msk [vmem:[%s419 + $0x60] sm:$0xff] %vm989, %v979
      %997 = vst.msk [vmem:[%s419 + $0x68] sm:$0xff] %vm989, %v980
      %998 = vst.msk [vmem:[%s419 + $0x80] sm:$0xff] %vm989, %v981
      %999 = vst.msk [vmem:[%s419 + $0x88] sm:$0xff] %vm989, %v982
      %1000 = vst.msk [vmem:[%s419 + $0xa0] sm:$0xff] %vm989, %v983
      %1001 = vst.msk [vmem:[%s419 + $0xa8] sm:$0xff] %vm989, %v984
      %1002 = vst.msk [vmem:[%s419 + $0xc0] sm:$0xff] %vm989, %v985
      %1003 = vst.msk [vmem:[%s419 + $0xc8] sm:$0xff] %vm989, %v986
      %1004 = vst.msk [vmem:[%s419 + $0xe0] sm:$0xff] %vm989, %v987
      %1005 = vst.msk [vmem:[%s419 + $0xe8] sm:$0xff] %vm989, %v988
      %1022 = vrot.lane.b32.xlu0 %v973, 96
      %v1023 = vpop.permute.xlu0 %1022
      %1024 = vrot.lane.b32.xlu0 %v974, 96
      %v1025 = vpop.permute.xlu0 %1024
      %1026 = vrot.lane.b32.xlu0 %v975, 96
      %v1027 = vpop.permute.xlu0 %1026
      %1028 = vrot.lane.b32.xlu0 %v976, 96
      %v1029 = vpop.permute.xlu0 %1028
      %1030 = vrot.lane.b32.xlu0 %v977, 96
      %v1031 = vpop.permute.xlu0 %1030
      %1032 = vrot.lane.b32.xlu0 %v978, 96
      %v1033 = vpop.permute.xlu0 %1032
      %1034 = vrot.lane.b32.xlu0 %v979, 96
      %v1035 = vpop.permute.xlu0 %1034
      %1036 = vrot.lane.b32.xlu0 %v980, 96
      %v1037 = vpop.permute.xlu0 %1036
      %1038 = vrot.lane.b32.xlu0 %v981, 96
      %v1039 = vpop.permute.xlu0 %1038
      %1040 = vrot.lane.b32.xlu0 %v982, 96
      %v1041 = vpop.permute.xlu0 %1040
      %1042 = vrot.lane.b32.xlu0 %v983, 96
      %v1043 = vpop.permute.xlu0 %1042
      %1044 = vrot.lane.b32.xlu0 %v984, 96
      %v1045 = vpop.permute.xlu0 %1044
      %1046 = vrot.lane.b32.xlu0 %v985, 96
      %v1047 = vpop.permute.xlu0 %1046
      %1048 = vrot.lane.b32.xlu0 %v986, 96
      %v1049 = vpop.permute.xlu0 %1048
      %1050 = vrot.lane.b32.xlu0 %v987, 96
      %v1051 = vpop.permute.xlu0 %1050
      %1052 = vrot.lane.b32.xlu0 %v988, 96
      %v1053 = vpop.permute.xlu0 %1052
      %s1070 = scalar_lea.vmem %s419, 16
      %1071 = vst.msk [vmem:[%s1070] sm:$0xff] %vm989, %v1023
      %1072 = vst.msk [vmem:[%s1070 + $0x8] sm:$0xff] %vm989, %v1025
      %1073 = vst.msk [vmem:[%s1070 + $0x20] sm:$0xff] %vm989, %v1027
      %1074 = vst.msk [vmem:[%s1070 + $0x28] sm:$0xff] %vm989, %v1029
      %1075 = vst.msk [vmem:[%s1070 + $0x40] sm:$0xff] %vm989, %v1031
      %1076 = vst.msk [vmem:[%s1070 + $0x48] sm:$0xff] %vm989, %v1033
      %1077 = vst.msk [vmem:[%s1070 + $0x60] sm:$0xff] %vm989, %v1035
      %1078 = vst.msk [vmem:[%s1070 + $0x68] sm:$0xff] %vm989, %v1037
      %1079 = vst.msk [vmem:[%s1070 + $0x80] sm:$0xff] %vm989, %v1039
      %1080 = vst.msk [vmem:[%s1070 + $0x88] sm:$0xff] %vm989, %v1041
      %1081 = vst.msk [vmem:[%s1070 + $0xa0] sm:$0xff] %vm989, %v1043
      %1082 = vst.msk [vmem:[%s1070 + $0xa8] sm:$0xff] %vm989, %v1045
      %1083 = vst.msk [vmem:[%s1070 + $0xc0] sm:$0xff] %vm989, %v1047
      %1084 = vst.msk [vmem:[%s1070 + $0xc8] sm:$0xff] %vm989, %v1049
      %1085 = vst.msk [vmem:[%s1070 + $0xe0] sm:$0xff] %vm989, %v1051
      %1086 = vst.msk [vmem:[%s1070 + $0xe8] sm:$0xff] %vm989, %v1053
      %s1087 = smul.u32 8, %s23
      %p1088 = scmp.lt.s32.totalorder %s22, 1
      %s1089 = scalar_select %p1088, %s22, 1
      %p1090 = scmp.lt.s32.totalorder %s1087, 15
      %s1091 = scalar_select %p1090, %s1087, 15
      %s1092 = smul.addr %s1091, 4
      %s1093 = smul.addr %s1089, 64
      %s1094 = sadd.s32 %s1092, %s1093
      %s1095 = smul.addr %s1094, 8
      %s1096 = scalar_lea.vmem %s6, %s1095
      // Predicated region
      $region45: #{_forward.1} parent=43 // pred_check
        %p1097 = pneg %p213
      $region46: #{_forward.1} parent=43 // pred_check_branch
        %1099 = sbr.rel (%p1097) target = $region48
      $region47: #{_forward.1} parent=43 // pred_region
        %s1100 = smul.u32 8, %s23
      $region48: #{_forward.1} parent=43 // pred_fallthru
        _
    $region44: #{_forward.1} parent=5 // pred_fallthru
      _
    %p1101 = scmp.le.s32.totalorder 2, %s13
    // Predicated region
    $region49: #{_forward.1} parent=5 // pred_check
      %p1102 = pneg %p1101
    $region50: #{_forward.1} parent=5 // pred_check_branch
      %1104 = sbr.rel (%p1102) target = $region52
    $region51: #{_forward.1} parent=5 // pred_region
      %s1105 = ssub.s32 %s13, 2
      // Predicated region
      $region53: #{_forward.1} parent=51 // pred_check
        %p1106 = pneg %p219
      $region54: #{_forward.1} parent=51 // pred_check_branch
        %1108 = sbr.rel (%p1106) target = $region56
      $region55: #{_forward.1} parent=51 // pred_region
        %s1109 = smul.u32 8, %s25
        %p1110 = scmp.lt.s32.totalorder %s24, 1
        %s1111 = scalar_select %p1110, %s24, 1
        %p1112 = scmp.lt.s32.totalorder %s1109, 15
        %s1113 = scalar_select %p1112, %s1109, 15
        %s1114 = smul.addr %s1113, 4
        %s1115 = smul.addr %s1111, 64
        %s1116 = sadd.s32 %s1114, %s1115
        %s1117 = smul.addr %s1116, 8
        %s1118 = scalar_lea.vmem %s6, %s1117
      $region56: #{_forward.1} parent=51 // pred_fallthru
        _
    $region52: #{_forward.1} parent=5 // pred_fallthru
      _
  $region6: #{_forward.1} parent=0 // loop_footer
    %s17 = sadd.s32 1, %s13
  $region7: #{_forward.1} parent=0 // loop_footer_branch
    %12 = sbr.rel target = $region3
  $region8: #{_forward.1} parent=0 // loop_exit
    _

</llo_original>
